<compile_context>
chip_gen: v5e
topology: v5e:2x2
jax: 0.10.0
libtpu: 0.0.40
codegen_flags: <defaults>
</compile_context>

<pallas_src>
import jax
import jax.numpy as jnp
import numpy as np
from jax import lax
from jax.experimental import pallas as pl
from jax.experimental.pallas import tpu as pltpu

_UNROLL_MAXLEN = 16


def _round_up(x, m):
    return (x + m - 1) // m * m


def iohmm_kernel(tok_ref, len_ref, emis_tbl_ref, transT_ref, outT_ref,
                 score_ref, emis_scr):
    """One batch block per grid step.

    tok_ref      : (maxlen*bb, 1)   int32  tokens, row r = t*bb + b
    len_ref      : (bb, 1)          int32  sequence lengths (padded rows = 0)
    emis_tbl_ref : (vocab, S)       f32    log_softmax(log_softmax(inp,0),-1)
    transT_ref   : (S, S)           f32    exp(log_softmax(trans,-1)).T
    outT_ref     : (S, NLpad)       f32    exp(log_softmax(out,-1)).T, col-padded
    score_ref    : (bb, NLpad)      f32    output scores (lane-dense slab)
    emis_scr     : (maxlen*bb, S)   f32    VMEM scratch: all emissions
    """
    R = tok_ref.shape[0]
    vocab, num_state = emis_tbl_ref.shape
    bb = len_ref.shape[0]
    maxlen = R // bb

    # --- all emissions in one MXU matmul (table already doubly normalized) ---
    col = lax.broadcasted_iota(jnp.int32, (R, vocab), 1)
    onehot = (col == tok_ref[...]).astype(jnp.float32)              # (R, vocab)
    emis_scr[...] = jnp.dot(onehot, emis_tbl_ref[...],
                            preferred_element_type=jnp.float32)     # (R, S)

    length = len_ref[...]                                           # (bb, 1)
    transT = transT_ref[...]                                        # (S, S)

    alpha0 = emis_scr[0:bb, :]                                      # t = 0
    hidden0 = jnp.where(length == 1, alpha0, jnp.zeros_like(alpha0))

    def step(t, alpha, hidden, emis_t):
        # logsumexp_j(log_T[i,j] + alpha[b,j]) -> m + log(exp(alpha-m) @ T^T)
        m = jnp.max(alpha, axis=-1, keepdims=True)                  # (bb, 1)
        acc = jnp.dot(jnp.exp(alpha - m), transT,
                      preferred_element_type=jnp.float32)           # (bb, S)
        alpha = m + jnp.log(acc) + emis_t
        hidden = jnp.where(length == t + 1, alpha, hidden)          # forwards[len-1]
        return alpha, hidden

    if maxlen <= _UNROLL_MAXLEN:
        alpha, hidden = alpha0, hidden0
        for t in range(1, maxlen):
            alpha, hidden = step(t, alpha, hidden,
                                 emis_scr[t * bb:(t + 1) * bb, :])
    else:
        def body(t, carry):
            alpha, hidden = carry
            off = pl.multiple_of(t * bb, bb)
            return step(t, alpha, hidden, emis_scr[pl.ds(off, bb), :])
        alpha, hidden = lax.fori_loop(1, maxlen, body, (alpha0, hidden0))

    # --- output scoring: logsumexp_j(log_out[c,j] + hidden[b,j]) via MXU ---
    mh = jnp.max(hidden, axis=-1, keepdims=True)
    sc = jnp.dot(jnp.exp(hidden - mh), outT_ref[...],
                 preferred_element_type=jnp.float32)                # (bb, NLpad)
    score_ref[...] = mh + jnp.log(sc)


def iohmm_forward(sentences, lengths, inp_w, trans_w, out_w, *,
                  block_batch=None):
    batch, maxlen = sentences.shape
    vocab, num_state = inp_w.shape
    nlabel = out_w.shape[0]

    # --- batch block selection ---
    b8 = _round_up(batch, 8)
    if block_batch is None:
        if b8 <= 256:
            block_batch = b8                      # one block: no grid overhead
        else:
            # fat blocks amortize per-step matmul latency; keep >= 2 blocks so
            # both v7x TensorCores get work on the "parallel" batch axis.
            block_batch = min(1024, _round_up(pl.cdiv(b8, 2), 8))
    bb = block_batch
    b_pad = _round_up(batch, bb)
    nblk = b_pad // bb
    nl_pad = _round_up(nlabel, 128)               # lane-dense output slab

    f32 = jnp.float32
    inp = inp_w.astype(f32)
    trans = trans_w.astype(f32)
    outw = out_w.astype(f32)

    # --- hoisted parameter normalization (grid-invariant, done once in XLA) ---
    emis_tbl = jax.nn.log_softmax(jax.nn.log_softmax(inp, axis=0), axis=-1)
    transT = jnp.exp(jax.nn.log_softmax(trans, axis=-1)).T            # (S, S)
    outT = jnp.zeros((num_state, nl_pad), f32).at[:, :nlabel].set(
        jnp.exp(jax.nn.log_softmax(outw, axis=-1)).T)                 # (S, NLpad)

    # --- tokens as a per-block (maxlen*bb, 1) slab, row = t*bb + b ---
    tok_pad = jnp.zeros((b_pad, maxlen), jnp.int32).at[:batch].set(
        sentences.astype(jnp.int32))
    tok_slab = (tok_pad.reshape(nblk, bb, maxlen)
                .transpose(0, 2, 1)
                .reshape(nblk, maxlen * bb, 1))
    lens = jnp.zeros((b_pad, 1), jnp.int32).at[:batch, 0].set(
        lengths.astype(jnp.int32))

    out = pl.pallas_call(
        iohmm_kernel,
        out_shape=jax.ShapeDtypeStruct((b_pad, nl_pad), f32),
        grid=(nblk,),
        in_specs=[
            pl.BlockSpec((None, maxlen * bb, 1), lambda i: (i, 0, 0)),   # tokens
            pl.BlockSpec((bb, 1), lambda i: (i, 0)),                     # lengths
            pl.BlockSpec((vocab, num_state), lambda i: (0, 0)),          # emission tbl
            pl.BlockSpec((num_state, num_state), lambda i: (0, 0)),      # exp(trans)^T
            pl.BlockSpec((num_state, nl_pad), lambda i: (0, 0)),         # exp(out)^T
        ],
        out_specs=pl.BlockSpec((bb, nl_pad), lambda i: (i, 0)),
        scratch_shapes=[pltpu.VMEM((maxlen * bb, num_state), f32)],
        compiler_params=pltpu.CompilerParams(
            dimension_semantics=("parallel",)),   # batch blocks across TCs (v7x)
    )(tok_slab, lens, emis_tbl, transT, outT)
    return out[:batch, :nlabel]


def iohmm_ref(sentences, lengths, inp_w, trans_w, out_w):
    """Pure-JAX reference mirroring the PyTorch forward."""
    batch, maxlen = sentences.shape
    norm_emb = jax.nn.log_softmax(inp_w, axis=0)
    sw = jnp.transpose(sentences)                              # (maxlen, batch)
    emis = jax.nn.log_softmax(
        norm_emb[sw.reshape(-1)].reshape(maxlen, batch, -1), axis=-1)
    log_trans = jax.nn.log_softmax(trans_w, axis=-1)
    log_out = jax.nn.log_softmax(out_w, axis=-1)
    alpha = emis[0]
    forwards = [alpha]
    for t in range(1, maxlen):
        alpha = jax.nn.logsumexp(log_trans[None] + alpha[:, None, :],
                                 axis=-1) + emis[t]
        forwards.append(alpha)
    stacked = jnp.stack(forwards)                              # (maxlen, B, S)
    hidden = stacked[lengths - 1, jnp.arange(batch)]           # (B, S)
    return jax.nn.logsumexp(log_out[None] + hidden[:, None, :], axis=-1)


if __name__ == "__main__":
    vocab_size, nlabel, num_state = 20, 4, 10
    batch, maxlen = 2, 8

    key = jax.random.PRNGKey(0)
    k_in, k_tr, k_out, k_sent = jax.random.split(key, 4)

    # deterministic parameter init: uniform(-0.5, 0.5), like reset_parameter()
    inp_w = jax.random.uniform(k_in, (vocab_size, num_state),
                               jnp.float32, -0.5, 0.5)
    trans_w = jax.random.uniform(k_tr, (num_state, num_state),
                                 jnp.float32, -0.5, 0.5)
    out_w = jax.random.uniform(k_out, (nlabel, num_state),
                               jnp.float32, -0.5, 0.5)

    sentences = jax.random.randint(k_sent, (batch, maxlen), 0, vocab_size,
                                   dtype=jnp.int32)
    lengths = jnp.array([5, 8], dtype=jnp.int32)

    score = iohmm_forward(sentences, lengths, inp_w, trans_w, out_w)
    score = jax.block_until_ready(score)

    expected = iohmm_ref(sentences, lengths, inp_w, trans_w, out_w)
    np.testing.assert_allclose(np.asarray(score), np.asarray(expected),
                               rtol=1e-4, atol=1e-4)
    print("KERNEL_OK")
</pallas_src>

<mosaic_0001>
module attributes {stable_mosaic.version = 11 : i64} {
  func.func @iohmm_kernel(%arg0: i32, %arg1: memref<1x64x1xi32, #tpu.memory_space<vmem>>, %arg2: memref<8x1xi32, #tpu.memory_space<vmem>>, %arg3: memref<20x10xf32, #tpu.memory_space<vmem>>, %arg4: memref<10x10xf32, #tpu.memory_space<vmem>>, %arg5: memref<10x128xf32, #tpu.memory_space<vmem>>, %arg6: memref<8x128xf32, #tpu.memory_space<vmem>>, %arg7: memref<64x10xf32, #tpu.memory_space<vmem>>) attributes {dimension_semantics = [#tpu.dimension_semantics<parallel>], iteration_bounds = array<i64: 1>, scalar_prefetch = 0 : i64, scratch_operands = 1 : i64, tpu.core_type = #tpu.core_type<tc>, window_params = [{transform_indices = @transform_0, window_bounds = array<i64: 1, 64, 1>}, {transform_indices = @transform_1, window_bounds = array<i64: 8, 1>}, {pipeline_mode = #tpu.pipeline_mode<synchronous>, transform_indices = @transform_2, window_bounds = array<i64: 20, 10>}, {pipeline_mode = #tpu.pipeline_mode<synchronous>, transform_indices = @transform_3, window_bounds = array<i64: 10, 10>}, {pipeline_mode = #tpu.pipeline_mode<synchronous>, transform_indices = @transform_4, window_bounds = array<i64: 10, 128>}, {transform_indices = @transform_5, window_bounds = array<i64: 8, 128>}]} {
    %0 = tpu.iota {dimensions = array<i32: 1>} : vector<64x20xi32>
    %c0 = arith.constant 0 : index
    %c0_0 = arith.constant 0 : index
    %c0_1 = arith.constant 0 : index
    %1 = vector.load %arg1[%c0, %c0_0, %c0_1] : memref<1x64x1xi32, #tpu.memory_space<vmem>>, vector<1x64x1xi32>
    %2 = vector.shape_cast %1 : vector<1x64x1xi32> to vector<64x1xi32>
    %3 = vector.broadcast %2 : vector<64x1xi32> to vector<64x20xi32>
    %4 = arith.cmpi eq, %0, %3 : vector<64x20xi32>
    %5 = arith.extui %4 : vector<64x20xi1> to vector<64x20xi32>
    %6 = arith.sitofp %5 : vector<64x20xi32> to vector<64x20xf32>
    %c0_2 = arith.constant 0 : index
    %c0_3 = arith.constant 0 : index
    %7 = vector.load %arg3[%c0_2, %c0_3] : memref<20x10xf32, #tpu.memory_space<vmem>>, vector<20x10xf32>
    %cst = arith.constant dense<0.000000e+00> : vector<64x10xf32>
    %8 = tpu.matmul %6, %7, %cst {dimension_numbers = #tpu.dot_dimension_numbers<[1], [0], [0], [1], [0, 0, 1, 1], [], []>} : vector<64x20xf32>, vector<20x10xf32>, vector<64x10xf32> -> vector<64x10xf32>
    %c0_4 = arith.constant 0 : index
    %c0_5 = arith.constant 0 : index
    %9 = vector.load %arg7[%c0_4, %c0_5] : memref<64x10xf32, #tpu.memory_space<vmem>>, vector<64x10xf32>
    tpu.vector_store %arg7[%c0_4, %c0_5], %8 {strides = array<i32>} : memref<64x10xf32, #tpu.memory_space<vmem>>, vector<64x10xf32>,
    %c0_6 = arith.constant 0 : index
    %c0_7 = arith.constant 0 : index
    %10 = vector.load %arg2[%c0_6, %c0_7] : memref<8x1xi32, #tpu.memory_space<vmem>>, vector<8x1xi32>
    %c0_8 = arith.constant 0 : index
    %c0_9 = arith.constant 0 : index
    %11 = vector.load %arg4[%c0_8, %c0_9] : memref<10x10xf32, #tpu.memory_space<vmem>>, vector<10x10xf32>
    %c0_10 = arith.constant 0 : index
    %c0_11 = arith.constant 0 : index
    %12 = vector.load %arg7[%c0_10, %c0_11] : memref<64x10xf32, #tpu.memory_space<vmem>>, vector<8x10xf32>
    %c1_i32 = arith.constant 1 : i32
    %13 = vector.broadcast %c1_i32 : i32 to vector<8x1xi32>
    %14 = arith.cmpi eq, %10, %13 : vector<8x1xi32>
    %cst_12 = arith.constant 0.000000e+00 : f32
    %15 = vector.broadcast %cst_12 : f32 to vector<8x10xf32>
    %16 = vector.shape_cast %14 : vector<8x1xi1> to vector<8x1xi1>
    %17 = vector.broadcast %16 : vector<8x1xi1> to vector<8x10xi1>
    %18 = arith.select %17, %12, %15 : vector<8x10xi1>, vector<8x10xf32>
    %c8 = arith.constant 8 : index
    %c0_13 = arith.constant 0 : index
    %19 = vector.load %arg7[%c8, %c0_13] : memref<64x10xf32, #tpu.memory_space<vmem>>, vector<8x10xf32>
    %cst_14 = arith.constant dense<0xFF800000> : vector<8xf32>
    %20 = vector.multi_reduction <maximumf>, %12, %cst_14 [1] : vector<8x10xf32> to vector<8xf32>
    %21 = vector.shape_cast %20 : vector<8xf32> to vector<8x1xf32>
    %22 = vector.broadcast %21 : vector<8x1xf32> to vector<8x10xf32>
    %23 = arith.subf %12, %22 : vector<8x10xf32>
    %24 = math.exp %23 : vector<8x10xf32>
    %cst_15 = arith.constant dense<0.000000e+00> : vector<8x10xf32>
    %25 = tpu.matmul %24, %11, %cst_15 {dimension_numbers = #tpu.dot_dimension_numbers<[1], [0], [0], [1], [0, 0, 1, 1], [], []>} : vector<8x10xf32>, vector<10x10xf32>, vector<8x10xf32> -> vector<8x10xf32>
    %26 = math.log %25 : vector<8x10xf32>
    %27 = vector.broadcast %21 : vector<8x1xf32> to vector<8x10xf32>
    %28 = arith.addf %27, %26 : vector<8x10xf32>
    %29 = arith.addf %28, %19 : vector<8x10xf32>
    %c2_i32 = arith.constant 2 : i32
    %30 = vector.broadcast %c2_i32 : i32 to vector<8x1xi32>
    %31 = arith.cmpi eq, %10, %30 : vector<8x1xi32>
    %32 = vector.shape_cast %31 : vector<8x1xi1> to vector<8x1xi1>
    %33 = vector.broadcast %32 : vector<8x1xi1> to vector<8x10xi1>
    %34 = arith.select %33, %29, %18 : vector<8x10xi1>, vector<8x10xf32>
    %c16 = arith.constant 16 : index
    %c0_16 = arith.constant 0 : index
    %35 = vector.load %arg7[%c16, %c0_16] : memref<64x10xf32, #tpu.memory_space<vmem>>, vector<8x10xf32>
    %cst_17 = arith.constant dense<0xFF800000> : vector<8xf32>
    %36 = vector.multi_reduction <maximumf>, %29, %cst_17 [1] : vector<8x10xf32> to vector<8xf32>
    %37 = vector.shape_cast %36 : vector<8xf32> to vector<8x1xf32>
    %38 = vector.broadcast %37 : vector<8x1xf32> to vector<8x10xf32>
    %39 = arith.subf %29, %38 : vector<8x10xf32>
    %40 = math.exp %39 : vector<8x10xf32>
    %cst_18 = arith.constant dense<0.000000e+00> : vector<8x10xf32>
    %41 = tpu.matmul %40, %11, %cst_18 {dimension_numbers = #tpu.dot_dimension_numbers<[1], [0], [0], [1], [0, 0, 1, 1], [], []>} : vector<8x10xf32>, vector<10x10xf32>, vector<8x10xf32> -> vector<8x10xf32>
    %42 = math.log %41 : vector<8x10xf32>
    %43 = vector.broadcast %37 : vector<8x1xf32> to vector<8x10xf32>
    %44 = arith.addf %43, %42 : vector<8x10xf32>
    %45 = arith.addf %44, %35 : vector<8x10xf32>
    %c3_i32 = arith.constant 3 : i32
    %46 = vector.broadcast %c3_i32 : i32 to vector<8x1xi32>
    %47 = arith.cmpi eq, %10, %46 : vector<8x1xi32>
    %48 = vector.shape_cast %47 : vector<8x1xi1> to vector<8x1xi1>
    %49 = vector.broadcast %48 : vector<8x1xi1> to vector<8x10xi1>
    %50 = arith.select %49, %45, %34 : vector<8x10xi1>, vector<8x10xf32>
    %c24 = arith.constant 24 : index
    %c0_19 = arith.constant 0 : index
    %51 = vector.load %arg7[%c24, %c0_19] : memref<64x10xf32, #tpu.memory_space<vmem>>, vector<8x10xf32>
    %cst_20 = arith.constant dense<0xFF800000> : vector<8xf32>
    %52 = vector.multi_reduction <maximumf>, %45, %cst_20 [1] : vector<8x10xf32> to vector<8xf32>
    %53 = vector.shape_cast %52 : vector<8xf32> to vector<8x1xf32>
    %54 = vector.broadcast %53 : vector<8x1xf32> to vector<8x10xf32>
    %55 = arith.subf %45, %54 : vector<8x10xf32>
    %56 = math.exp %55 : vector<8x10xf32>
    %cst_21 = arith.constant dense<0.000000e+00> : vector<8x10xf32>
    %57 = tpu.matmul %56, %11, %cst_21 {dimension_numbers = #tpu.dot_dimension_numbers<[1], [0], [0], [1], [0, 0, 1, 1], [], []>} : vector<8x10xf32>, vector<10x10xf32>, vector<8x10xf32> -> vector<8x10xf32>
    %58 = math.log %57 : vector<8x10xf32>
    %59 = vector.broadcast %53 : vector<8x1xf32> to vector<8x10xf32>
    %60 = arith.addf %59, %58 : vector<8x10xf32>
    %61 = arith.addf %60, %51 : vector<8x10xf32>
    %c4_i32 = arith.constant 4 : i32
    %62 = vector.broadcast %c4_i32 : i32 to vector<8x1xi32>
    %63 = arith.cmpi eq, %10, %62 : vector<8x1xi32>
    %64 = vector.shape_cast %63 : vector<8x1xi1> to vector<8x1xi1>
    %65 = vector.broadcast %64 : vector<8x1xi1> to vector<8x10xi1>
    %66 = arith.select %65, %61, %50 : vector<8x10xi1>, vector<8x10xf32>
    %c32 = arith.constant 32 : index
    %c0_22 = arith.constant 0 : index
    %67 = vector.load %arg7[%c32, %c0_22] : memref<64x10xf32, #tpu.memory_space<vmem>>, vector<8x10xf32>
    %cst_23 = arith.constant dense<0xFF800000> : vector<8xf32>
    %68 = vector.multi_reduction <maximumf>, %61, %cst_23 [1] : vector<8x10xf32> to vector<8xf32>
    %69 = vector.shape_cast %68 : vector<8xf32> to vector<8x1xf32>
    %70 = vector.broadcast %69 : vector<8x1xf32> to vector<8x10xf32>
    %71 = arith.subf %61, %70 : vector<8x10xf32>
    %72 = math.exp %71 : vector<8x10xf32>
    %cst_24 = arith.constant dense<0.000000e+00> : vector<8x10xf32>
    %73 = tpu.matmul %72, %11, %cst_24 {dimension_numbers = #tpu.dot_dimension_numbers<[1], [0], [0], [1], [0, 0, 1, 1], [], []>} : vector<8x10xf32>, vector<10x10xf32>, vector<8x10xf32> -> vector<8x10xf32>
    %74 = math.log %73 : vector<8x10xf32>
    %75 = vector.broadcast %69 : vector<8x1xf32> to vector<8x10xf32>
    %76 = arith.addf %75, %74 : vector<8x10xf32>
    %77 = arith.addf %76, %67 : vector<8x10xf32>
    %c5_i32 = arith.constant 5 : i32
    %78 = vector.broadcast %c5_i32 : i32 to vector<8x1xi32>
    %79 = arith.cmpi eq, %10, %78 : vector<8x1xi32>
    %80 = vector.shape_cast %79 : vector<8x1xi1> to vector<8x1xi1>
    %81 = vector.broadcast %80 : vector<8x1xi1> to vector<8x10xi1>
    %82 = arith.select %81, %77, %66 : vector<8x10xi1>, vector<8x10xf32>
    %c40 = arith.constant 40 : index
    %c0_25 = arith.constant 0 : index
    %83 = vector.load %arg7[%c40, %c0_25] : memref<64x10xf32, #tpu.memory_space<vmem>>, vector<8x10xf32>
    %cst_26 = arith.constant dense<0xFF800000> : vector<8xf32>
    %84 = vector.multi_reduction <maximumf>, %77, %cst_26 [1] : vector<8x10xf32> to vector<8xf32>
    %85 = vector.shape_cast %84 : vector<8xf32> to vector<8x1xf32>
    %86 = vector.broadcast %85 : vector<8x1xf32> to vector<8x10xf32>
    %87 = arith.subf %77, %86 : vector<8x10xf32>
    %88 = math.exp %87 : vector<8x10xf32>
    %cst_27 = arith.constant dense<0.000000e+00> : vector<8x10xf32>
    %89 = tpu.matmul %88, %11, %cst_27 {dimension_numbers = #tpu.dot_dimension_numbers<[1], [0], [0], [1], [0, 0, 1, 1], [], []>} : vector<8x10xf32>, vector<10x10xf32>, vector<8x10xf32> -> vector<8x10xf32>
    %90 = math.log %89 : vector<8x10xf32>
    %91 = vector.broadcast %85 : vector<8x1xf32> to vector<8x10xf32>
    %92 = arith.addf %91, %90 : vector<8x10xf32>
    %93 = arith.addf %92, %83 : vector<8x10xf32>
    %c6_i32 = arith.constant 6 : i32
    %94 = vector.broadcast %c6_i32 : i32 to vector<8x1xi32>
    %95 = arith.cmpi eq, %10, %94 : vector<8x1xi32>
    %96 = vector.shape_cast %95 : vector<8x1xi1> to vector<8x1xi1>
    %97 = vector.broadcast %96 : vector<8x1xi1> to vector<8x10xi1>
    %98 = arith.select %97, %93, %82 : vector<8x10xi1>, vector<8x10xf32>
    %c48 = arith.constant 48 : index
    %c0_28 = arith.constant 0 : index
    %99 = vector.load %arg7[%c48, %c0_28] : memref<64x10xf32, #tpu.memory_space<vmem>>, vector<8x10xf32>
    %cst_29 = arith.constant dense<0xFF800000> : vector<8xf32>
    %100 = vector.multi_reduction <maximumf>, %93, %cst_29 [1] : vector<8x10xf32> to vector<8xf32>
    %101 = vector.shape_cast %100 : vector<8xf32> to vector<8x1xf32>
    %102 = vector.broadcast %101 : vector<8x1xf32> to vector<8x10xf32>
    %103 = arith.subf %93, %102 : vector<8x10xf32>
    %104 = math.exp %103 : vector<8x10xf32>
    %cst_30 = arith.constant dense<0.000000e+00> : vector<8x10xf32>
    %105 = tpu.matmul %104, %11, %cst_30 {dimension_numbers = #tpu.dot_dimension_numbers<[1], [0], [0], [1], [0, 0, 1, 1], [], []>} : vector<8x10xf32>, vector<10x10xf32>, vector<8x10xf32> -> vector<8x10xf32>
    %106 = math.log %105 : vector<8x10xf32>
    %107 = vector.broadcast %101 : vector<8x1xf32> to vector<8x10xf32>
    %108 = arith.addf %107, %106 : vector<8x10xf32>
    %109 = arith.addf %108, %99 : vector<8x10xf32>
    %c7_i32 = arith.constant 7 : i32
    %110 = vector.broadcast %c7_i32 : i32 to vector<8x1xi32>
    %111 = arith.cmpi eq, %10, %110 : vector<8x1xi32>
    %112 = vector.shape_cast %111 : vector<8x1xi1> to vector<8x1xi1>
    %113 = vector.broadcast %112 : vector<8x1xi1> to vector<8x10xi1>
    %114 = arith.select %113, %109, %98 : vector<8x10xi1>, vector<8x10xf32>
    %c56 = arith.constant 56 : index
    %c0_31 = arith.constant 0 : index
    %115 = vector.load %arg7[%c56, %c0_31] : memref<64x10xf32, #tpu.memory_space<vmem>>, vector<8x10xf32>
    %cst_32 = arith.constant dense<0xFF800000> : vector<8xf32>
    %116 = vector.multi_reduction <maximumf>, %109, %cst_32 [1] : vector<8x10xf32> to vector<8xf32>
    %117 = vector.shape_cast %116 : vector<8xf32> to vector<8x1xf32>
    %118 = vector.broadcast %117 : vector<8x1xf32> to vector<8x10xf32>
    %119 = arith.subf %109, %118 : vector<8x10xf32>
    %120 = math.exp %119 : vector<8x10xf32>
    %cst_33 = arith.constant dense<0.000000e+00> : vector<8x10xf32>
    %121 = tpu.matmul %120, %11, %cst_33 {dimension_numbers = #tpu.dot_dimension_numbers<[1], [0], [0], [1], [0, 0, 1, 1], [], []>} : vector<8x10xf32>, vector<10x10xf32>, vector<8x10xf32> -> vector<8x10xf32>
    %122 = math.log %121 : vector<8x10xf32>
    %123 = vector.broadcast %117 : vector<8x1xf32> to vector<8x10xf32>
    %124 = arith.addf %123, %122 : vector<8x10xf32>
    %125 = arith.addf %124, %115 : vector<8x10xf32>
    %c8_i32 = arith.constant 8 : i32
    %126 = vector.broadcast %c8_i32 : i32 to vector<8x1xi32>
    %127 = arith.cmpi eq, %10, %126 : vector<8x1xi32>
    %128 = vector.shape_cast %127 : vector<8x1xi1> to vector<8x1xi1>
    %129 = vector.broadcast %128 : vector<8x1xi1> to vector<8x10xi1>
    %130 = arith.select %129, %125, %114 : vector<8x10xi1>, vector<8x10xf32>
    %cst_34 = arith.constant dense<0xFF800000> : vector<8xf32>
    %131 = vector.multi_reduction <maximumf>, %130, %cst_34 [1] : vector<8x10xf32> to vector<8xf32>
    %132 = vector.shape_cast %131 : vector<8xf32> to vector<8x1xf32>
    %133 = vector.broadcast %132 : vector<8x1xf32> to vector<8x10xf32>
    %134 = arith.subf %130, %133 : vector<8x10xf32>
    %135 = math.exp %134 : vector<8x10xf32>
    %c0_35 = arith.constant 0 : index
    %c0_36 = arith.constant 0 : index
    %136 = vector.load %arg5[%c0_35, %c0_36] : memref<10x128xf32, #tpu.memory_space<vmem>>, vector<10x128xf32>
    %cst_37 = arith.constant dense<0.000000e+00> : vector<8x128xf32>
    %137 = tpu.matmul %135, %136, %cst_37 {dimension_numbers = #tpu.dot_dimension_numbers<[1], [0], [0], [1], [0, 0, 1, 1], [], []>} : vector<8x10xf32>, vector<10x128xf32>, vector<8x128xf32> -> vector<8x128xf32>
    %138 = math.log %137 : vector<8x128xf32>
    %139 = vector.broadcast %132 : vector<8x1xf32> to vector<8x128xf32>
    %140 = arith.addf %139, %138 : vector<8x128xf32>
    %c0_38 = arith.constant 0 : index
    %c0_39 = arith.constant 0 : index
    %141 = vector.load %arg6[%c0_38, %c0_39] : memref<8x128xf32, #tpu.memory_space<vmem>>, vector<8x128xf32>
    tpu.vector_store %arg6[%c0_38, %c0_39], %140 {strides = array<i32>} : memref<8x128xf32, #tpu.memory_space<vmem>>, vector<8x128xf32>,
    return
  }
  func.func @transform_0(%arg0: i32) -> (i32, i32, i32) {
    %c0_i32 = arith.constant 0 : i32
    %c0_i32_0 = arith.constant 0 : i32
    %c0_i32_1 = arith.constant 0 : i32
    return %arg0, %c0_i32, %c0_i32_0 : i32, i32, i32
  }
  func.func @transform_1(%arg0: i32) -> (i32, i32) {
    %c0_i32 = arith.constant 0 : i32
    %c0_i32_0 = arith.constant 0 : i32
    return %arg0, %c0_i32 : i32, i32
  }
  func.func @transform_2(%arg0: i32) -> (i32, i32) {
    %c0_i32 = arith.constant 0 : i32
    %c0_i32_0 = arith.constant 0 : i32
    %c0_i32_1 = arith.constant 0 : i32
    return %c0_i32, %c0_i32_0 : i32, i32
  }
  func.func @transform_3(%arg0: i32) -> (i32, i32) {
    %c0_i32 = arith.constant 0 : i32
    %c0_i32_0 = arith.constant 0 : i32
    %c0_i32_1 = arith.constant 0 : i32
    return %c0_i32, %c0_i32_0 : i32, i32
  }
  func.func @transform_4(%arg0: i32) -> (i32, i32) {
    %c0_i32 = arith.constant 0 : i32
    %c0_i32_0 = arith.constant 0 : i32
    %c0_i32_1 = arith.constant 0 : i32
    return %c0_i32, %c0_i32_0 : i32, i32
  }
  func.func @transform_5(%arg0: i32) -> (i32, i32) {
    %c0_i32 = arith.constant 0 : i32
    %c0_i32_0 = arith.constant 0 : i32
    return %arg0, %c0_i32 : i32, i32
  }
}

</mosaic_0001>

<llo_original>
// kernel: tpu_custom_call.1
$region0: #{tpu_custom_call.1}
  #allocation0 [shape = 'u32[]', space=smem, size = 0x4, offset = 0x4, fixed_abs, tag = 'smem constant byte address 0x4 - core index']
  #allocation1 [shape = 'u32[72,128]{1,0:T(1,128)}', space=vmem, size = 0x9000, scoped, tag = 'internal scratch']
  #allocation2 [shape = 'f32[64,10]{1,0:T(8,128)}', space=vmem, size = 0x8000, scoped, tag = 'scratch operand']
  %s0 = inlined_call_operand.vmem [shape: s32[1,64,1], index: 0, kind: input, shape index: {}]
  %s1 = inlined_call_operand.vmem [shape: s32[8,1], index: 1, kind: input, shape index: {}]
  %s2 = inlined_call_operand.vmem [shape: f32[20,10], index: 2, kind: input, shape index: {}]
  %s3 = inlined_call_operand.vmem [shape: f32[10,10], index: 3, kind: input, shape index: {}]
  %s4 = inlined_call_operand.vmem [shape: f32[10,128], index: 4, kind: input, shape index: {}]
  %s5 = inlined_call_operand.hbm [shape: f32[8,128], index: 5, kind: output, shape index: {}]
  %s6 = sld [smem:[#allocation0]]
  $region30: #{tpu_custom_call.1} parent=0
    _
  %s8 = ssub.s32 1, %s6
  %s9 = scalar_select 0, %s8, %s6
  $region1: #{tpu_custom_call.1} parent=0
    #allocation3 [shape = 'u8[4096]{0}', space=vmem, size = 0x1000, scoped, tag = 'output window, operand 0, single buffered']
    #allocation4 [shape = 's32[1]{0}', space=sflag, size = 0x4, scoped, tag = 'scoped memory for tpu_custom_call.1']
    %10 = vsyncpa [#allocation4], 0
    // Predicated region
    $region2: #{tpu_custom_call.1} parent=1 // pred_check
      _
    $region3: #{tpu_custom_call.1} parent=1 // pred_check_branch
      %12 = sbr.rel (0) target = $region5
    $region4: #{tpu_custom_call.1} parent=1 // pred_region
      _
    $region5: #{tpu_custom_call.1} parent=1 // pred_fallthru
      _
    // Predicated region
    $region6: #{tpu_custom_call.1} parent=1 // pred_check
      _
    $region7: #{tpu_custom_call.1} parent=1 // pred_check_branch
      %14 = sbr.rel (0) target = $region9
    $region8: #{tpu_custom_call.1} parent=1 // pred_region
      _
    $region9: #{tpu_custom_call.1} parent=1 // pred_fallthru
      _
    // Predicated region
    $region10: #{tpu_custom_call.1} parent=1 // pred_check
      _
    $region11: #{tpu_custom_call.1} parent=1 // pred_check_branch
      %16 = sbr.rel (0) target = $region13
    $region12: #{tpu_custom_call.1} parent=1 // pred_region
      _
    $region13: #{tpu_custom_call.1} parent=1 // pred_fallthru
      _
    // Predicated region
    $region14: #{tpu_custom_call.1} parent=1 // pred_check
      _
    $region15: #{tpu_custom_call.1} parent=1 // pred_check_branch
      %18 = sbr.rel (0) target = $region17
    $region16: #{tpu_custom_call.1} parent=1 // pred_region
      _
    $region17: #{tpu_custom_call.1} parent=1 // pred_fallthru
      _
    // Predicated region
    $region18: #{tpu_custom_call.1} parent=1 // pred_check
      _
    $region19: #{tpu_custom_call.1} parent=1 // pred_check_branch
      %20 = sbr.rel (0) target = $region21
    $region20: #{tpu_custom_call.1} parent=1 // pred_region
      _
    $region21: #{tpu_custom_call.1} parent=1 // pred_fallthru
      _
    %v21 = vlaneseq
    %v22 = vand.u32 %v21, 127
    %v23 = vld [vmem:[%s0] sm:$0xff]
    %v24 = vld [vmem:[%s0 + $0x8] sm:$0xff]
    %v25 = vld [vmem:[%s0 + $0x10] sm:$0xff]
    %v26 = vld [vmem:[%s0 + $0x18] sm:$0xff]
    %v27 = vld [vmem:[%s0 + $0x20] sm:$0xff]
    %v28 = vld [vmem:[%s0 + $0x28] sm:$0xff]
    %v29 = vld [vmem:[%s0 + $0x30] sm:$0xff]
    %v30 = vld [vmem:[%s0 + $0x38] sm:$0xff]
    %31 = vset.pattern.permute.xlu0 0
    %32 = vperm.xlu0 %31, %v23
    %v33 = vpop.permute.xlu0 %32
    %34 = vset.pattern.permute.xlu0 0
    %35 = vperm.xlu0 %34, %v24
    %v36 = vpop.permute.xlu0 %35
    %37 = vset.pattern.permute.xlu0 0
    %38 = vperm.xlu0 %37, %v25
    %v39 = vpop.permute.xlu0 %38
    %40 = vset.pattern.permute.xlu0 0
    %41 = vperm.xlu0 %40, %v26
    %v42 = vpop.permute.xlu0 %41
    %43 = vset.pattern.permute.xlu0 0
    %44 = vperm.xlu0 %43, %v27
    %v45 = vpop.permute.xlu0 %44
    %46 = vset.pattern.permute.xlu0 0
    %47 = vperm.xlu0 %46, %v28
    %v48 = vpop.permute.xlu0 %47
    %49 = vset.pattern.permute.xlu0 0
    %50 = vperm.xlu0 %49, %v29
    %v51 = vpop.permute.xlu0 %50
    %52 = vset.pattern.permute.xlu0 0
    %53 = vperm.xlu0 %52, %v30
    %v54 = vpop.permute.xlu0 %53
    %vm55 = vcmp.eq.s32.totalorder %v22, %v33
    %vm56 = vcmp.eq.s32.totalorder %v22, %v36
    %vm57 = vcmp.eq.s32.totalorder %v22, %v39
    %vm58 = vcmp.eq.s32.totalorder %v22, %v42
    %vm59 = vcmp.eq.s32.totalorder %v22, %v45
    %vm60 = vcmp.eq.s32.totalorder %v22, %v48
    %vm61 = vcmp.eq.s32.totalorder %v22, %v51
    %vm62 = vcmp.eq.s32.totalorder %v22, %v54
    %v63 = vsel %vm55, 1, 0
    %v64 = vsel %vm56, 1, 0
    %v65 = vsel %vm57, 1, 0
    %v66 = vsel %vm58, 1, 0
    %v67 = vsel %vm59, 1, 0
    %v68 = vsel %vm60, 1, 0
    %v69 = vsel %vm61, 1, 0
    %v70 = vsel %vm62, 1, 0
    %v71 = vcvt.s32.f32 %v63
    %v72 = vcvt.s32.f32 %v64
    %v73 = vcvt.s32.f32 %v65
    %v74 = vcvt.s32.f32 %v66
    %v75 = vcvt.s32.f32 %v67
    %v76 = vcvt.s32.f32 %v68
    %v77 = vcvt.s32.f32 %v69
    %v78 = vcvt.s32.f32 %v70
    %v79 = vld [vmem:[%s2] sm:$0xff]
    %v80 = vld [vmem:[%s2 + $0x8] sm:$0xff]
    %v81 = vld [vmem:[%s2 + $0x10] sm:$0xf]
    %vm82 = vcmask 162816
    %v84 = vsel %vm82, %v71, 0
    %v87 = vsel %vm82, %v72, 0
    %v90 = vsel %vm82, %v73, 0
    %v93 = vsel %vm82, %v74, 0
    %v96 = vsel %vm82, %v75, 0
    %v99 = vsel %vm82, %v76, 0
    %v102 = vsel %vm82, %v77, 0
    %v105 = vsel %vm82, %v78, 0
    %vm107 = vcmask 1043456
    %v109 = vsel %vm107, %v81, 0
    %111 = vmatpush.msra.mxu0 0.0
    %112 = vmatpush.msra.mxu0 0.0
    %113 = vmatpush.msra.mxu0 0.0
    %114 = vmatpush.msra.mxu0 0.0
    %115 = vmatpush.msra.mxu0 0.0
    %116 = vmatpush.msra.mxu0 0.0
    %117 = vmatpush.msra.mxu0 0.0
    %118 = vmatpush.msra.mxu0 0.0
    %119 = vmatpush.msra.mxu0 0.0
    %120 = vmatpush.msra.mxu0 0.0
    %121 = vmatpush.msra.mxu0 0.0
    %122 = vmatpush.msra.mxu0 0.0
    %123 = vmatpush.msra.mxu0 0.0
    %124 = vmatpush.msra.mxu0 %v109
    %125 = vmatpush.msra.mxu0 %v80
    %126 = vmatpush.msra.mxu0 %v79
    %127 = vmatmul.f32.gmra.mxu0 %v84
    %v128 = vpop.f32.mrf.mxu0
    %v129 = vadd.f32 0.0, %v128
    %130 = vmatmul.f32.gmra.mxu0 %v87
    %v131 = vpop.f32.mrf.mxu0
    %v132 = vadd.f32 0.0, %v131
    %133 = vmatmul.f32.gmra.mxu0 %v90
    %v134 = vpop.f32.mrf.mxu0
    %v135 = vadd.f32 0.0, %v134
    %136 = vmatmul.f32.gmra.mxu0 %v93
    %v137 = vpop.f32.mrf.mxu0
    %v138 = vadd.f32 0.0, %v137
    %139 = vmatmul.f32.gmra.mxu0 %v96
    %v140 = vpop.f32.mrf.mxu0
    %v141 = vadd.f32 0.0, %v140
    %142 = vmatmul.f32.gmra.mxu0 %v99
    %v143 = vpop.f32.mrf.mxu0
    %v144 = vadd.f32 0.0, %v143
    %145 = vmatmul.f32.gmra.mxu0 %v102
    %v146 = vpop.f32.mrf.mxu0
    %v147 = vadd.f32 0.0, %v146
    %148 = vmatmul.f32.gmra.mxu0 %v105
    %v149 = vpop.f32.mrf.mxu0
    %v150 = vadd.f32 0.0, %v149
    %151 = vdwg.mxu0
    %vm152 = vcmask 80896
    %153 = vst.msk [vmem:[#allocation2] sm:$0xff] %vm152, %v129
    %154 = vst.msk [vmem:[#allocation2 + $0x8] sm:$0xff] %vm152, %v132
    %155 = vst.msk [vmem:[#allocation2 + $0x10] sm:$0xff] %vm152, %v135
    %156 = vst.msk [vmem:[#allocation2 + $0x18] sm:$0xff] %vm152, %v138
    %157 = vst.msk [vmem:[#allocation2 + $0x20] sm:$0xff] %vm152, %v141
    %158 = vst.msk [vmem:[#allocation2 + $0x28] sm:$0xff] %vm152, %v144
    %159 = vst.msk [vmem:[#allocation2 + $0x30] sm:$0xff] %vm152, %v147
    %160 = vst.msk [vmem:[#allocation2 + $0x38] sm:$0xff] %vm152, %v150
    %v161 = vld [vmem:[%s1] sm:$0xff]
    %v162 = vld [vmem:[%s3] sm:$0xff]
    %v163 = vld [vmem:[%s3 + $0x8] sm:$0x3]
    %v164 = vld [vmem:[#allocation2] sm:$0xff]
    %vm165 = vcmp.eq.s32.totalorder %v161, 1
    %v166 = vsel %vm165, 1, 0
    %167 = vset.pattern.permute.xlu0 0
    %168 = vperm.xlu0 %167, %v166
    %v169 = vpop.permute.xlu0 %168
    %vm170 = vcmp.eq.s32.totalorder %v169, 1
    %v171 = vsel %vm170, %v164, 0.0
    %v172 = vld [vmem:[#allocation2 + $0x8] sm:$0xff]
    %v173 = vsel %vm152, %v164, -inf
    %174 = vmax.xlane.f32.xlu0 %v173
    %v175 = vpop.xlane.xlu0 %174
    %v176 = vsub.f32 %v164, %v175
    %v177 = vmul.f32 %v176, 1.442695
    %v178 = vpow.pop %v177
    %v180 = vsel %vm152, %v178, 0
    %vm182 = vcmask 1041408
    %v184 = vsel %vm182, %v163, 0
    %186 = vmatpush.msra.mxu0 0.0
    %187 = vmatpush.msra.mxu0 0.0
    %188 = vmatpush.msra.mxu0 0.0
    %189 = vmatpush.msra.mxu0 0.0
    %190 = vmatpush.msra.mxu0 0.0
    %191 = vmatpush.msra.mxu0 0.0
    %192 = vmatpush.msra.mxu0 0.0
    %193 = vmatpush.msra.mxu0 0.0
    %194 = vmatpush.msra.mxu0 0.0
    %195 = vmatpush.msra.mxu0 0.0
    %196 = vmatpush.msra.mxu0 0.0
    %197 = vmatpush.msra.mxu0 0.0
    %198 = vmatpush.msra.mxu0 0.0
    %199 = vmatpush.msra.mxu0 0.0
    %200 = vmatpush.msra.mxu0 %v184
    %201 = vmatpush.msra.mxu0 %v162
    %202 = vmatmul.f32.gmra.mxu0 %v180
    %v203 = vpop.f32.mrf.mxu0
    %v204 = vadd.f32 0.0, %v203
    %205 = vdwg.mxu0
    %v206 = vlog2.pop %v204
    %v207 = vmul.f32 %v206, 0.6931472
    %v208 = vadd.f32 %v175, %v207
    %v209 = vadd.f32 %v208, %v172
    %vm210 = vcmp.eq.s32.totalorder %v161, 2
    %v211 = vsel %vm210, 1, 0
    %212 = vset.pattern.permute.xlu0 0
    %213 = vperm.xlu0 %212, %v211
    %v214 = vpop.permute.xlu0 %213
    %vm215 = vcmp.eq.s32.totalorder %v214, 1
    %v216 = vsel %vm215, %v209, %v171
    %v217 = vld [vmem:[#allocation2 + $0x10] sm:$0xff]
    %v218 = vsel %vm152, %v209, -inf
    %219 = vmax.xlane.f32.xlu0 %v218
    %v220 = vpop.xlane.xlu0 %219
    %v221 = vsub.f32 %v209, %v220
    %v222 = vmul.f32 %v221, 1.442695
    %v223 = vpow.pop %v222
    %v225 = vsel %vm152, %v223, 0
    %227 = vmatpush.msra.mxu0 0.0
    %228 = vmatpush.msra.mxu0 0.0
    %229 = vmatpush.msra.mxu0 0.0
    %230 = vmatpush.msra.mxu0 0.0
    %231 = vmatpush.msra.mxu0 0.0
    %232 = vmatpush.msra.mxu0 0.0
    %233 = vmatpush.msra.mxu0 0.0
    %234 = vmatpush.msra.mxu0 0.0
    %235 = vmatpush.msra.mxu0 0.0
    %236 = vmatpush.msra.mxu0 0.0
    %237 = vmatpush.msra.mxu0 0.0
    %238 = vmatpush.msra.mxu0 0.0
    %239 = vmatpush.msra.mxu0 0.0
    %240 = vmatpush.msra.mxu0 0.0
    %241 = vmatpush.msra.mxu0 %v184
    %242 = vmatpush.msra.mxu0 %v162
    %243 = vmatmul.f32.gmra.mxu0 %v225
    %v244 = vpop.f32.mrf.mxu0
    %v245 = vadd.f32 0.0, %v244
    %246 = vdwg.mxu0
    %v247 = vlog2.pop %v245
    %v248 = vmul.f32 %v247, 0.6931472
    %v249 = vadd.f32 %v220, %v248
    %v250 = vadd.f32 %v249, %v217
    %vm251 = vcmp.eq.s32.totalorder %v161, 3
    %v252 = vsel %vm251, 1, 0
    %253 = vset.pattern.permute.xlu0 0
    %254 = vperm.xlu0 %253, %v252
    %v255 = vpop.permute.xlu0 %254
    %vm256 = vcmp.eq.s32.totalorder %v255, 1
    %v257 = vsel %vm256, %v250, %v216
    %v258 = vld [vmem:[#allocation2 + $0x18] sm:$0xff]
    %v259 = vsel %vm152, %v250, -inf
    %260 = vmax.xlane.f32.xlu0 %v259
    %v261 = vpop.xlane.xlu0 %260
    %v262 = vsub.f32 %v250, %v261
    %v263 = vmul.f32 %v262, 1.442695
    %v264 = vpow.pop %v263
    %v266 = vsel %vm152, %v264, 0
    %268 = vmatpush.msra.mxu0 0.0
    %269 = vmatpush.msra.mxu0 0.0
    %270 = vmatpush.msra.mxu0 0.0
    %271 = vmatpush.msra.mxu0 0.0
    %272 = vmatpush.msra.mxu0 0.0
    %273 = vmatpush.msra.mxu0 0.0
    %274 = vmatpush.msra.mxu0 0.0
    %275 = vmatpush.msra.mxu0 0.0
    %276 = vmatpush.msra.mxu0 0.0
    %277 = vmatpush.msra.mxu0 0.0
    %278 = vmatpush.msra.mxu0 0.0
    %279 = vmatpush.msra.mxu0 0.0
    %280 = vmatpush.msra.mxu0 0.0
    %281 = vmatpush.msra.mxu0 0.0
    %282 = vmatpush.msra.mxu0 %v184
    %283 = vmatpush.msra.mxu0 %v162
    %284 = vmatmul.f32.gmra.mxu0 %v266
    %v285 = vpop.f32.mrf.mxu0
    %v286 = vadd.f32 0.0, %v285
    %287 = vdwg.mxu0
    %v288 = vlog2.pop %v286
    %v289 = vmul.f32 %v288, 0.6931472
    %v290 = vadd.f32 %v261, %v289
    %v291 = vadd.f32 %v290, %v258
    %vm292 = vcmp.eq.s32.totalorder %v161, 4
    %v293 = vsel %vm292, 1, 0
    %294 = vset.pattern.permute.xlu0 0
    %295 = vperm.xlu0 %294, %v293
    %v296 = vpop.permute.xlu0 %295
    %vm297 = vcmp.eq.s32.totalorder %v296, 1
    %v298 = vsel %vm297, %v291, %v257
    %v299 = vld [vmem:[#allocation2 + $0x20] sm:$0xff]
    %v300 = vsel %vm152, %v291, -inf
    %301 = vmax.xlane.f32.xlu0 %v300
    %v302 = vpop.xlane.xlu0 %301
    %v303 = vsub.f32 %v291, %v302
    %v304 = vmul.f32 %v303, 1.442695
    %v305 = vpow.pop %v304
    %v307 = vsel %vm152, %v305, 0
    %309 = vmatpush.msra.mxu0 0.0
    %310 = vmatpush.msra.mxu0 0.0
    %311 = vmatpush.msra.mxu0 0.0
    %312 = vmatpush.msra.mxu0 0.0
    %313 = vmatpush.msra.mxu0 0.0
    %314 = vmatpush.msra.mxu0 0.0
    %315 = vmatpush.msra.mxu0 0.0
    %316 = vmatpush.msra.mxu0 0.0
    %317 = vmatpush.msra.mxu0 0.0
    %318 = vmatpush.msra.mxu0 0.0
    %319 = vmatpush.msra.mxu0 0.0
    %320 = vmatpush.msra.mxu0 0.0
    %321 = vmatpush.msra.mxu0 0.0
    %322 = vmatpush.msra.mxu0 0.0
    %323 = vmatpush.msra.mxu0 %v184
    %324 = vmatpush.msra.mxu0 %v162
    %325 = vmatmul.f32.gmra.mxu0 %v307
    %v326 = vpop.f32.mrf.mxu0
    %v327 = vadd.f32 0.0, %v326
    %328 = vdwg.mxu0
    %v329 = vlog2.pop %v327
    %v330 = vmul.f32 %v329, 0.6931472
    %v331 = vadd.f32 %v302, %v330
    %v332 = vadd.f32 %v331, %v299
    %vm333 = vcmp.eq.s32.totalorder %v161, 5
    %v334 = vsel %vm333, 1, 0
    %335 = vset.pattern.permute.xlu0 0
    %336 = vperm.xlu0 %335, %v334
    %v337 = vpop.permute.xlu0 %336
    %vm338 = vcmp.eq.s32.totalorder %v337, 1
    %v339 = vsel %vm338, %v332, %v298
    %v340 = vld [vmem:[#allocation2 + $0x28] sm:$0xff]
    %v341 = vsel %vm152, %v332, -inf
    %342 = vmax.xlane.f32.xlu0 %v341
    %v343 = vpop.xlane.xlu0 %342
    %v344 = vsub.f32 %v332, %v343
    %v345 = vmul.f32 %v344, 1.442695
    %v346 = vpow.pop %v345
    %v348 = vsel %vm152, %v346, 0
    %350 = vmatpush.msra.mxu0 0.0
    %351 = vmatpush.msra.mxu0 0.0
    %352 = vmatpush.msra.mxu0 0.0
    %353 = vmatpush.msra.mxu0 0.0
    %354 = vmatpush.msra.mxu0 0.0
    %355 = vmatpush.msra.mxu0 0.0
    %356 = vmatpush.msra.mxu0 0.0
    %357 = vmatpush.msra.mxu0 0.0
    %358 = vmatpush.msra.mxu0 0.0
    %359 = vmatpush.msra.mxu0 0.0
    %360 = vmatpush.msra.mxu0 0.0
    %361 = vmatpush.msra.mxu0 0.0
    %362 = vmatpush.msra.mxu0 0.0
    %363 = vmatpush.msra.mxu0 0.0
    %364 = vmatpush.msra.mxu0 %v184
    %365 = vmatpush.msra.mxu0 %v162
    %366 = vmatmul.f32.gmra.mxu0 %v348
    %v367 = vpop.f32.mrf.mxu0
    %v368 = vadd.f32 0.0, %v367
    %369 = vdwg.mxu0
    %v370 = vlog2.pop %v368
    %v371 = vmul.f32 %v370, 0.6931472
    %v372 = vadd.f32 %v343, %v371
    %v373 = vadd.f32 %v372, %v340
    %vm374 = vcmp.eq.s32.totalorder %v161, 6
    %v375 = vsel %vm374, 1, 0
    %376 = vset.pattern.permute.xlu0 0
    %377 = vperm.xlu0 %376, %v375
    %v378 = vpop.permute.xlu0 %377
    %vm379 = vcmp.eq.s32.totalorder %v378, 1
    %v380 = vsel %vm379, %v373, %v339
    %v381 = vld [vmem:[#allocation2 + $0x30] sm:$0xff]
    %v382 = vsel %vm152, %v373, -inf
    %383 = vmax.xlane.f32.xlu0 %v382
    %v384 = vpop.xlane.xlu0 %383
    %v385 = vsub.f32 %v373, %v384
    %v386 = vmul.f32 %v385, 1.442695
    %v387 = vpow.pop %v386
    %v389 = vsel %vm152, %v387, 0
    %391 = vmatpush.msra.mxu0 0.0
    %392 = vmatpush.msra.mxu0 0.0
    %393 = vmatpush.msra.mxu0 0.0
    %394 = vmatpush.msra.mxu0 0.0
    %395 = vmatpush.msra.mxu0 0.0
    %396 = vmatpush.msra.mxu0 0.0
    %397 = vmatpush.msra.mxu0 0.0
    %398 = vmatpush.msra.mxu0 0.0
    %399 = vmatpush.msra.mxu0 0.0
    %400 = vmatpush.msra.mxu0 0.0
    %401 = vmatpush.msra.mxu0 0.0
    %402 = vmatpush.msra.mxu0 0.0
    %403 = vmatpush.msra.mxu0 0.0
    %404 = vmatpush.msra.mxu0 0.0
    %405 = vmatpush.msra.mxu0 %v184
    %406 = vmatpush.msra.mxu0 %v162
    %407 = vmatmul.f32.gmra.mxu0 %v389
    %v408 = vpop.f32.mrf.mxu0
    %v409 = vadd.f32 0.0, %v408
    %410 = vdwg.mxu0
    %v411 = vlog2.pop %v409
    %v412 = vmul.f32 %v411, 0.6931472
    %v413 = vadd.f32 %v384, %v412
    %v414 = vadd.f32 %v413, %v381
    %vm415 = vcmp.eq.s32.totalorder %v161, 7
    %v416 = vsel %vm415, 1, 0
    %417 = vset.pattern.permute.xlu0 0
    %418 = vperm.xlu0 %417, %v416
    %v419 = vpop.permute.xlu0 %418
    %vm420 = vcmp.eq.s32.totalorder %v419, 1
    %v421 = vsel %vm420, %v414, %v380
    %v422 = vld [vmem:[#allocation2 + $0x38] sm:$0xff]
    %v423 = vsel %vm152, %v414, -inf
    %424 = vmax.xlane.f32.xlu0 %v423
    %v425 = vpop.xlane.xlu0 %424
    %v426 = vsub.f32 %v414, %v425
    %v427 = vmul.f32 %v426, 1.442695
    %v428 = vpow.pop %v427
    %v430 = vsel %vm152, %v428, 0
    %432 = vmatpush.msra.mxu0 0.0
    %433 = vmatpush.msra.mxu0 0.0
    %434 = vmatpush.msra.mxu0 0.0
    %435 = vmatpush.msra.mxu0 0.0
    %436 = vmatpush.msra.mxu0 0.0
    %437 = vmatpush.msra.mxu0 0.0
    %438 = vmatpush.msra.mxu0 0.0
    %439 = vmatpush.msra.mxu0 0.0
    %440 = vmatpush.msra.mxu0 0.0
    %441 = vmatpush.msra.mxu0 0.0
    %442 = vmatpush.msra.mxu0 0.0
    %443 = vmatpush.msra.mxu0 0.0
    %444 = vmatpush.msra.mxu0 0.0
    %445 = vmatpush.msra.mxu0 0.0
    %446 = vmatpush.msra.mxu0 %v184
    %447 = vmatpush.msra.mxu0 %v162
    %448 = vmatmul.f32.gmra.mxu0 %v430
    %v449 = vpop.f32.mrf.mxu0
    %v450 = vadd.f32 0.0, %v449
    %451 = vdwg.mxu0
    %v452 = vlog2.pop %v450
    %v453 = vmul.f32 %v452, 0.6931472
    %v454 = vadd.f32 %v425, %v453
    %v455 = vadd.f32 %v454, %v422
    %vm456 = vcmp.eq.s32.totalorder %v161, 8
    %v457 = vsel %vm456, 1, 0
    %458 = vset.pattern.permute.xlu0 0
    %459 = vperm.xlu0 %458, %v457
    %v460 = vpop.permute.xlu0 %459
    %vm461 = vcmp.eq.s32.totalorder %v460, 1
    %v462 = vsel %vm461, %v455, %v421
    %v463 = vsel %vm152, %v462, -inf
    %464 = vmax.xlane.f32.xlu0 %v463
    %v465 = vpop.xlane.xlu0 %464
    %v466 = vsub.f32 %v462, %v465
    %v467 = vmul.f32 %v466, 1.442695
    %v468 = vpow.pop %v467
    %v469 = vld [vmem:[%s4] sm:$0xff]
    %v470 = vld [vmem:[%s4 + $0x8] sm:$0x3]
    %v472 = vsel %vm152, %v468, 0
    %v475 = vsel %vm182, %v470, 0
    %477 = vmatpush.msra.mxu0 0.0
    %478 = vmatpush.msra.mxu0 0.0
    %479 = vmatpush.msra.mxu0 0.0
    %480 = vmatpush.msra.mxu0 0.0
    %481 = vmatpush.msra.mxu0 0.0
    %482 = vmatpush.msra.mxu0 0.0
    %483 = vmatpush.msra.mxu0 0.0
    %484 = vmatpush.msra.mxu0 0.0
    %485 = vmatpush.msra.mxu0 0.0
    %486 = vmatpush.msra.mxu0 0.0
    %487 = vmatpush.msra.mxu0 0.0
    %488 = vmatpush.msra.mxu0 0.0
    %489 = vmatpush.msra.mxu0 0.0
    %490 = vmatpush.msra.mxu0 0.0
    %491 = vmatpush.msra.mxu0 %v475
    %492 = vmatpush.msra.mxu0 %v469
    %493 = vmatmul.f32.gmra.mxu0 %v472
    %v494 = vpop.f32.mrf.mxu0
    %v495 = vadd.f32 0.0, %v494
    %496 = vdwg.mxu0
    %v497 = vlog2.pop %v495
    %v498 = vmul.f32 %v497, 0.6931472
    %v499 = vadd.f32 %v465, %v498
    %500 = vst [vmem:[#allocation3] sm:$0xff] %v499
    // Predicated region
    $region22: #{tpu_custom_call.1} parent=1 // pred_check
      _
    $region23: #{tpu_custom_call.1} parent=1 // pred_check_branch
      %502 = sbr.rel (0) target = $region25
    $region24: #{tpu_custom_call.1} parent=1 // pred_region
      %504 = vsyncadd [#allocation4], 0
      %s506 = sshll.u32 [#allocation3], 4
      %s507 = int_to_ptr.vmem [resolvable:$true] %s506
      %s508 = sshll.u32 %s5, 4
      %s509 = int_to_ptr.hbm [resolvable:$true] %s508
      %511 = dma.vmem_to_hbm [thread:$0]  %s507, 128, %s509, [#allocation4]
    $region25: #{tpu_custom_call.1} parent=1 // pred_fallthru
      _
    // Predicated region
    $region26: #{tpu_custom_call.1} parent=1 // pred_check
      _
    $region27: #{tpu_custom_call.1} parent=1 // pred_check_branch
      %513 = sbr.rel (0) target = $region29
    $region28: #{tpu_custom_call.1} parent=1 // pred_region
      %515 = dma.done [#allocation4], 128
    $region29: #{tpu_custom_call.1} parent=1 // pred_fallthru
      _
    %516 = vsyncpa [#allocation4], 1

</llo_original>
